<compile_context>
chip_gen: v5e
topology: v5e:2x2
jax: 0.10.0
libtpu: 0.0.40
codegen_flags: <defaults>
</compile_context>

<pallas_src>
import functools
import math

import numpy as np
import jax
import jax.numpy as jnp
from jax import lax
from jax.experimental import pallas as pl
from jax.experimental.pallas import tpu as pltpu


def _conv3x3_kernel(w_ref, b_ref, x_ref, o_ref, pk_ref, *, img_w, n_imgs, n_slots):
    """One batch tile of the circular 3x3 conv, computed lane-dense in VMEM.

    w_ref: (3, 3) f32 weights in SMEM.  b_ref: (1,) f32 bias in SMEM.
    x_ref / o_ref: (blk_n, H, W) native-layout blocks in VMEM.
    pk_ref: (H, n_slots * W) f32 VMEM scratch holding the lane-dense packed
            block (reused for the result before unpacking).
    """
    H = x_ref.shape[1]
    L = n_slots * img_w

    # ---- pack: native (blk_n, H, W) -> lane-dense (H, n_slots*W) ------------
    # Fully static (trace-unrolled) slab copies: every index / lane offset is a
    # Python int, so these lower to plain vector loads + masked stores.  Slots
    # beyond n_imgs replicate the last image so L stays a multiple of 128;
    # their results are simply never copied back out.
    for s in range(n_slots):
        src = min(s, n_imgs - 1)
        pk_ref[:, s * img_w:(s + 1) * img_w] = x_ref[src].astype(jnp.float32)

    x = pk_ref[...]

    # ---- circular W taps: lane rolls + per-image wrap fixup ------------------
    # Masks come from a single (1, L) row (hoisted out of the block-sized
    # work); only the two selects below touch full (H, L) tiles.
    col = lax.broadcasted_iota(jnp.int32, (1, L), 1) % img_w
    is_w_first = col == 0
    is_w_last = col == img_w - 1
    left = jnp.where(is_w_first,
                     pltpu.roll(x, (L - (img_w - 1)) % L, 1),   # x[:, (w-1) mod W] at w == 0
                     pltpu.roll(x, 1, 1))                       # x[:,  w-1]        at w >= 1
    right = jnp.where(is_w_last,
                      pltpu.roll(x, img_w - 1, 1),              # x[:, (w+1) mod W] at w == W-1
                      pltpu.roll(x, L - 1, 1))                  # x[:,  w+1]        at w <= W-2
    cols = (left, x, right)                                     # j = 0, 1, 2

    # ---- accumulate the 9 taps (bias fused into the init) --------------------
    acc = jnp.full((H, L), b_ref[0], jnp.float32)
    for j in range(3):
        xc = cols[j]
        for i in range(3):
            di = i - 1                                          # row offset of this tap
            tap = xc if di == 0 else pltpu.roll(xc, (-di) % H, 0)
            acc = acc + tap * w_ref[i, j]

    # ---- unpack: lane-dense result -> native (blk_n, H, W) block -------------
    pk_ref[...] = acc
    for s in range(n_imgs):
        o_ref[s] = pk_ref[:, s * img_w:(s + 1) * img_w].astype(o_ref.dtype)


def line_net_forward(x_nchw, weight, bias):
    """LineNet forward: circular ("repeating") pad + 3x3 conv, 1 -> 1 channels.

    x_nchw: (N, 1, H, W) float32. weight: (3, 3). bias: (1,). Returns (N, 1, H, W).
    """
    N, C, H, W = x_nchw.shape
    assert C == 1
    # TODO(synk): H not a multiple of 8 (sublane) would need a fixed-up sublane
    # roll; not needed for this model.
    assert H % 8 == 0, "H must be a multiple of 8 for the sublane rolls"
    dtype = x_nchw.dtype
    itemsize = jnp.dtype(dtype).itemsize

    x = jnp.squeeze(x_nchw, axis=1)            # (N, H, W): size-1 squeeze, no HBM copy

    # ---- per-generation VMEM budget ------------------------------------------
    slots_unit = math.lcm(W, 128) // W         # images per 128-lane multiple
    try:
        vmem_cap = int(pltpu.get_tpu_info().vmem_capacity_bytes)
    except Exception:
        vmem_cap = 64 << 20                    # conservative (v7x-sized) fallback
    vmem_limit = min(64 << 20, vmem_cap // 2)  # 64 MiB on v5e/v6e, 32 MiB on v7x

    # Per-image VMEM: double-buffered native in+out blocks are lane-padded to
    # 128 (4 * ceil(H,8)*128*4 bytes), plus the dense packed scratch (H*W*4)
    # and ~6 live block-sized f32 temps in the compute (x, left, right, acc,
    # rolled tap, select temp).
    pad_img = (-(-H // 8) * 8) * 128 * 4
    dense_img = H * W * 4
    per_img = 4 * pad_img + 7 * dense_img
    blk_cap = max(1, (vmem_limit - (2 << 20)) // per_img)

    MAX_TRACE_SLABS = 512                      # keeps the unrolled pack/unpack trace small
    target_steps = 8                           # >= 4 pipelined grid steps per TensorCore
    blk_n = min(N, blk_cap, MAX_TRACE_SLABS,
                max(min(N, 8 * slots_unit), pl.cdiv(N, target_steps)))
    # Prefer a tile that divides N (no ragged last tile) unless that shrinks
    # the tile by more than 2x; otherwise rely on Pallas' boundary masking.
    if N % blk_n != 0:
        for d in range(blk_n, 0, -1):
            if N % d == 0:
                if d * 2 >= blk_n:
                    blk_n = d
                break
    n_slots = -(-blk_n // slots_unit) * slots_unit   # round up so lanes are 128-aligned
    grid_n = pl.cdiv(N, blk_n)

    cost = pl.CostEstimate(
        flops=18 * N * H * W,
        transcendentals=0,
        bytes_accessed=2 * N * H * W * itemsize + 40,
    )

    out = pl.pallas_call(
        functools.partial(_conv3x3_kernel, img_w=W, n_imgs=blk_n, n_slots=n_slots),
        out_shape=jax.ShapeDtypeStruct((N, H, W), dtype),
        grid=(grid_n,),
        in_specs=[
            pl.BlockSpec(memory_space=pltpu.MemorySpace.SMEM),   # weight (3, 3)
            pl.BlockSpec(memory_space=pltpu.MemorySpace.SMEM),   # bias (1,)
            pl.BlockSpec((blk_n, H, W), lambda b: (b, 0, 0)),    # native batch tile
        ],
        out_specs=pl.BlockSpec((blk_n, H, W), lambda b: (b, 0, 0)),
        scratch_shapes=[pltpu.VMEM((H, n_slots * W), jnp.float32)],
        compiler_params=pltpu.CompilerParams(
            dimension_semantics=("parallel",),
            vmem_limit_bytes=vmem_limit,
        ),
        cost_estimate=cost,
    )(weight, bias, x)

    return out[:, None, :, :]                  # (N, 1, H, W): size-1 expand, no HBM copy


def _reference(x_nchw, weight, bias):
    """Pure-JAX reference: circular pad + valid 3x3 conv (matches RepeatingConv)."""
    pad = 1
    xp = jnp.pad(x_nchw, ((0, 0), (0, 0), (pad, pad), (pad, pad)), mode="wrap")
    w4 = weight[None, None, :, :]  # (O=1, I=1, 3, 3)
    y = lax.conv_general_dilated(
        xp, w4, window_strides=(1, 1), padding="VALID",
        dimension_numbers=("NCHW", "OIHW", "NCHW"))
    return y + bias.reshape(1, 1, 1, 1)


if __name__ == "__main__":
    key = jax.random.PRNGKey(0)
    k_x, k_w, k_b = jax.random.split(key, 3)

    N, C, H, W = 2, 1, 16, 16
    x = jax.random.normal(k_x, (N, C, H, W), dtype=jnp.float32)

    # Deterministic Conv2d(1, 1, 3) parameter init (PyTorch default U(-1/sqrt(fan_in), +)).
    fan_in = 1 * 3 * 3
    bound = 1.0 / np.sqrt(fan_in)
    weight = jax.random.uniform(k_w, (3, 3), jnp.float32, -bound, bound)
    bias = jax.random.uniform(k_b, (1,), jnp.float32, -bound, bound)

    y = line_net_forward(x, weight, bias)
    y = jax.block_until_ready(y)

    y_ref = jax.block_until_ready(_reference(x, weight, bias))
    assert y.shape == (N, C, H, W)
    assert np.allclose(np.asarray(y), np.asarray(y_ref), atol=1e-5, rtol=1e-5)

    print("KERNEL_OK")
</pallas_src>

<mosaic_0001>
module attributes {stable_mosaic.version = 11 : i64} {
  func.func @_conv3x3_kernel(%arg0: i32, %arg1: memref<3x3xf32, #tpu.memory_space<smem>>, %arg2: memref<1xf32, #tpu.memory_space<smem>>, %arg3: memref<2x16x16xf32, #tpu.memory_space<vmem>>, %arg4: memref<2x16x16xf32, #tpu.memory_space<vmem>>, %arg5: memref<16x128xf32, #tpu.memory_space<vmem>>) attributes {dimension_semantics = [#tpu.dimension_semantics<parallel>], iteration_bounds = array<i64: 1>, scalar_prefetch = 0 : i64, scratch_operands = 1 : i64, tpu.core_type = #tpu.core_type<tc>, window_params = [{transform_indices = @transform_0, window_bounds = array<i64: 3, 3>}, {transform_indices = @transform_1, window_bounds = array<i64: 1>}, {transform_indices = @transform_2, window_bounds = array<i64: 2, 16, 16>}, {transform_indices = @transform_3, window_bounds = array<i64: 2, 16, 16>}]} {
    %c0 = arith.constant 0 : index
    %c0_0 = arith.constant 0 : index
    %c0_1 = arith.constant 0 : index
    %0 = vector.load %arg3[%c0, %c0_0, %c0_1] : memref<2x16x16xf32, #tpu.memory_space<vmem>>, vector<1x16x16xf32>
    %1 = vector.shape_cast %0 : vector<1x16x16xf32> to vector<16x16xf32>
    %c0_2 = arith.constant 0 : index
    %c0_3 = arith.constant 0 : index
    %2 = vector.load %arg5[%c0_2, %c0_3] : memref<16x128xf32, #tpu.memory_space<vmem>>, vector<16x16xf32>
    tpu.vector_store %arg5[%c0_2, %c0_3], %1 {strides = array<i32>} : memref<16x128xf32, #tpu.memory_space<vmem>>, vector<16x16xf32>,
    %c1 = arith.constant 1 : index
    %c0_4 = arith.constant 0 : index
    %c0_5 = arith.constant 0 : index
    %3 = vector.load %arg3[%c1, %c0_4, %c0_5] : memref<2x16x16xf32, #tpu.memory_space<vmem>>, vector<1x16x16xf32>
    %4 = vector.shape_cast %3 : vector<1x16x16xf32> to vector<16x16xf32>
    %c0_6 = arith.constant 0 : index
    %c16 = arith.constant 16 : index
    %5 = vector.load %arg5[%c0_6, %c16] : memref<16x128xf32, #tpu.memory_space<vmem>>, vector<16x16xf32>
    tpu.vector_store %arg5[%c0_6, %c16], %4 {strides = array<i32>} : memref<16x128xf32, #tpu.memory_space<vmem>>, vector<16x16xf32>,
    %c1_7 = arith.constant 1 : index
    %c0_8 = arith.constant 0 : index
    %c0_9 = arith.constant 0 : index
    %6 = vector.load %arg3[%c1_7, %c0_8, %c0_9] : memref<2x16x16xf32, #tpu.memory_space<vmem>>, vector<1x16x16xf32>
    %7 = vector.shape_cast %6 : vector<1x16x16xf32> to vector<16x16xf32>
    %c0_10 = arith.constant 0 : index
    %c32 = arith.constant 32 : index
    %8 = vector.load %arg5[%c0_10, %c32] : memref<16x128xf32, #tpu.memory_space<vmem>>, vector<16x16xf32>
    tpu.vector_store %arg5[%c0_10, %c32], %7 {strides = array<i32>} : memref<16x128xf32, #tpu.memory_space<vmem>>, vector<16x16xf32>,
    %c1_11 = arith.constant 1 : index
    %c0_12 = arith.constant 0 : index
    %c0_13 = arith.constant 0 : index
    %9 = vector.load %arg3[%c1_11, %c0_12, %c0_13] : memref<2x16x16xf32, #tpu.memory_space<vmem>>, vector<1x16x16xf32>
    %10 = vector.shape_cast %9 : vector<1x16x16xf32> to vector<16x16xf32>
    %c0_14 = arith.constant 0 : index
    %c48 = arith.constant 48 : index
    %11 = vector.load %arg5[%c0_14, %c48] : memref<16x128xf32, #tpu.memory_space<vmem>>, vector<16x16xf32>
    tpu.vector_store %arg5[%c0_14, %c48], %10 {strides = array<i32>} : memref<16x128xf32, #tpu.memory_space<vmem>>, vector<16x16xf32>,
    %c1_15 = arith.constant 1 : index
    %c0_16 = arith.constant 0 : index
    %c0_17 = arith.constant 0 : index
    %12 = vector.load %arg3[%c1_15, %c0_16, %c0_17] : memref<2x16x16xf32, #tpu.memory_space<vmem>>, vector<1x16x16xf32>
    %13 = vector.shape_cast %12 : vector<1x16x16xf32> to vector<16x16xf32>
    %c0_18 = arith.constant 0 : index
    %c64 = arith.constant 64 : index
    %14 = vector.load %arg5[%c0_18, %c64] : memref<16x128xf32, #tpu.memory_space<vmem>>, vector<16x16xf32>
    tpu.vector_store %arg5[%c0_18, %c64], %13 {strides = array<i32>} : memref<16x128xf32, #tpu.memory_space<vmem>>, vector<16x16xf32>,
    %c1_19 = arith.constant 1 : index
    %c0_20 = arith.constant 0 : index
    %c0_21 = arith.constant 0 : index
    %15 = vector.load %arg3[%c1_19, %c0_20, %c0_21] : memref<2x16x16xf32, #tpu.memory_space<vmem>>, vector<1x16x16xf32>
    %16 = vector.shape_cast %15 : vector<1x16x16xf32> to vector<16x16xf32>
    %c0_22 = arith.constant 0 : index
    %c80 = arith.constant 80 : index
    %17 = vector.load %arg5[%c0_22, %c80] : memref<16x128xf32, #tpu.memory_space<vmem>>, vector<16x16xf32>
    tpu.vector_store %arg5[%c0_22, %c80], %16 {strides = array<i32>} : memref<16x128xf32, #tpu.memory_space<vmem>>, vector<16x16xf32>,
    %c1_23 = arith.constant 1 : index
    %c0_24 = arith.constant 0 : index
    %c0_25 = arith.constant 0 : index
    %18 = vector.load %arg3[%c1_23, %c0_24, %c0_25] : memref<2x16x16xf32, #tpu.memory_space<vmem>>, vector<1x16x16xf32>
    %19 = vector.shape_cast %18 : vector<1x16x16xf32> to vector<16x16xf32>
    %c0_26 = arith.constant 0 : index
    %c96 = arith.constant 96 : index
    %20 = vector.load %arg5[%c0_26, %c96] : memref<16x128xf32, #tpu.memory_space<vmem>>, vector<16x16xf32>
    tpu.vector_store %arg5[%c0_26, %c96], %19 {strides = array<i32>} : memref<16x128xf32, #tpu.memory_space<vmem>>, vector<16x16xf32>,
    %c1_27 = arith.constant 1 : index
    %c0_28 = arith.constant 0 : index
    %c0_29 = arith.constant 0 : index
    %21 = vector.load %arg3[%c1_27, %c0_28, %c0_29] : memref<2x16x16xf32, #tpu.memory_space<vmem>>, vector<1x16x16xf32>
    %22 = vector.shape_cast %21 : vector<1x16x16xf32> to vector<16x16xf32>
    %c0_30 = arith.constant 0 : index
    %c112 = arith.constant 112 : index
    %23 = vector.load %arg5[%c0_30, %c112] : memref<16x128xf32, #tpu.memory_space<vmem>>, vector<16x16xf32>
    tpu.vector_store %arg5[%c0_30, %c112], %22 {strides = array<i32>} : memref<16x128xf32, #tpu.memory_space<vmem>>, vector<16x16xf32>,
    %c0_31 = arith.constant 0 : index
    %c0_32 = arith.constant 0 : index
    %24 = vector.load %arg5[%c0_31, %c0_32] : memref<16x128xf32, #tpu.memory_space<vmem>>, vector<16x128xf32>
    %25 = tpu.iota {dimensions = array<i32: 1>} : vector<1x128xi32>
    %c16_i32 = arith.constant 16 : i32
    %c0_i32 = arith.constant 0 : i32
    %26 = arith.cmpi eq, %c16_i32, %c0_i32 : i32
    %c1_i32 = arith.constant 1 : i32
    %27 = arith.select %26, %c1_i32, %c16_i32 : i32
    %28 = vector.broadcast %27 : i32 to vector<1x128xi32>
    %29 = arith.remsi %25, %28 : vector<1x128xi32>
    %c0_i32_33 = arith.constant 0 : i32
    %30 = vector.broadcast %c0_i32_33 : i32 to vector<1x128xi32>
    %31 = arith.cmpi ne, %29, %30 : vector<1x128xi32>
    %c0_i32_34 = arith.constant 0 : i32
    %32 = vector.broadcast %c0_i32_34 : i32 to vector<1x128xi32>
    %33 = arith.cmpi slt, %29, %32 : vector<1x128xi32>
    %c0_i32_35 = arith.constant 0 : i32
    %34 = arith.cmpi slt, %27, %c0_i32_35 : i32
    %35 = vector.broadcast %34 : i1 to vector<1x128xi1>
    %36 = vector.broadcast %35 : vector<1x128xi1> to vector<1x128xi1>
    %37 = arith.xori %33, %36 : vector<1x128xi1>
    %38 = arith.andi %37, %31 : vector<1x128xi1>
    %39 = vector.broadcast %27 : i32 to vector<1x128xi32>
    %40 = arith.addi %29, %39 : vector<1x128xi32>
    %41 = arith.select %38, %40, %29 : vector<1x128xi1>, vector<1x128xi32>
    %c0_i32_36 = arith.constant 0 : i32
    %42 = vector.broadcast %c0_i32_36 : i32 to vector<1x128xi32>
    %43 = arith.cmpi eq, %41, %42 : vector<1x128xi32>
    %c15_i32 = arith.constant 15 : i32
    %44 = vector.broadcast %c15_i32 : i32 to vector<1x128xi32>
    %45 = arith.cmpi eq, %41, %44 : vector<1x128xi32>
    %c113_i32 = arith.constant 113 : i32
    %46 = tpu.dynamic_rotate %24 by %c113_i32 dim 1 : vector<16x128xf32>, i32 -> vector<16x128xf32>
    %c1_i32_37 = arith.constant 1 : i32
    %47 = tpu.dynamic_rotate %24 by %c1_i32_37 dim 1 : vector<16x128xf32>, i32 -> vector<16x128xf32>
    %48 = vector.shape_cast %43 : vector<1x128xi1> to vector<1x128xi1>
    %49 = vector.broadcast %48 : vector<1x128xi1> to vector<16x128xi1>
    %50 = arith.select %49, %46, %47 : vector<16x128xi1>, vector<16x128xf32>
    %c15_i32_38 = arith.constant 15 : i32
    %51 = tpu.dynamic_rotate %24 by %c15_i32_38 dim 1 : vector<16x128xf32>, i32 -> vector<16x128xf32>
    %c127_i32 = arith.constant 127 : i32
    %52 = tpu.dynamic_rotate %24 by %c127_i32 dim 1 : vector<16x128xf32>, i32 -> vector<16x128xf32>
    %53 = vector.shape_cast %45 : vector<1x128xi1> to vector<1x128xi1>
    %54 = vector.broadcast %53 : vector<1x128xi1> to vector<16x128xi1>
    %55 = arith.select %54, %51, %52 : vector<16x128xi1>, vector<16x128xf32>
    %c0_39 = arith.constant 0 : index
    %56 = memref.load %arg2[%c0_39] : memref<1xf32, #tpu.memory_space<smem>>
    %57 = vector.broadcast %56 : f32 to vector<16x128xf32>
    %c1_i32_40 = arith.constant 1 : i32
    %58 = tpu.dynamic_rotate %50 by %c1_i32_40 dim 0 : vector<16x128xf32>, i32 -> vector<16x128xf32>
    %c0_41 = arith.constant 0 : index
    %c0_42 = arith.constant 0 : index
    %59 = memref.load %arg1[%c0_41, %c0_42] : memref<3x3xf32, #tpu.memory_space<smem>>
    %60 = vector.broadcast %59 : f32 to vector<16x128xf32>
    %61 = arith.mulf %58, %60 : vector<16x128xf32>
    %62 = arith.addf %57, %61 : vector<16x128xf32>
    %c1_43 = arith.constant 1 : index
    %c0_44 = arith.constant 0 : index
    %63 = memref.load %arg1[%c1_43, %c0_44] : memref<3x3xf32, #tpu.memory_space<smem>>
    %64 = vector.broadcast %63 : f32 to vector<16x128xf32>
    %65 = arith.mulf %50, %64 : vector<16x128xf32>
    %66 = arith.addf %62, %65 : vector<16x128xf32>
    %c15_i32_45 = arith.constant 15 : i32
    %67 = tpu.dynamic_rotate %50 by %c15_i32_45 dim 0 : vector<16x128xf32>, i32 -> vector<16x128xf32>
    %c2 = arith.constant 2 : index
    %c0_46 = arith.constant 0 : index
    %68 = memref.load %arg1[%c2, %c0_46] : memref<3x3xf32, #tpu.memory_space<smem>>
    %69 = vector.broadcast %68 : f32 to vector<16x128xf32>
    %70 = arith.mulf %67, %69 : vector<16x128xf32>
    %71 = arith.addf %66, %70 : vector<16x128xf32>
    %c1_i32_47 = arith.constant 1 : i32
    %72 = tpu.dynamic_rotate %24 by %c1_i32_47 dim 0 : vector<16x128xf32>, i32 -> vector<16x128xf32>
    %c0_48 = arith.constant 0 : index
    %c1_49 = arith.constant 1 : index
    %73 = memref.load %arg1[%c0_48, %c1_49] : memref<3x3xf32, #tpu.memory_space<smem>>
    %74 = vector.broadcast %73 : f32 to vector<16x128xf32>
    %75 = arith.mulf %72, %74 : vector<16x128xf32>
    %76 = arith.addf %71, %75 : vector<16x128xf32>
    %c1_50 = arith.constant 1 : index
    %c1_51 = arith.constant 1 : index
    %77 = memref.load %arg1[%c1_50, %c1_51] : memref<3x3xf32, #tpu.memory_space<smem>>
    %78 = vector.broadcast %77 : f32 to vector<16x128xf32>
    %79 = arith.mulf %24, %78 : vector<16x128xf32>
    %80 = arith.addf %76, %79 : vector<16x128xf32>
    %c15_i32_52 = arith.constant 15 : i32
    %81 = tpu.dynamic_rotate %24 by %c15_i32_52 dim 0 : vector<16x128xf32>, i32 -> vector<16x128xf32>
    %c2_53 = arith.constant 2 : index
    %c1_54 = arith.constant 1 : index
    %82 = memref.load %arg1[%c2_53, %c1_54] : memref<3x3xf32, #tpu.memory_space<smem>>
    %83 = vector.broadcast %82 : f32 to vector<16x128xf32>
    %84 = arith.mulf %81, %83 : vector<16x128xf32>
    %85 = arith.addf %80, %84 : vector<16x128xf32>
    %c1_i32_55 = arith.constant 1 : i32
    %86 = tpu.dynamic_rotate %55 by %c1_i32_55 dim 0 : vector<16x128xf32>, i32 -> vector<16x128xf32>
    %c0_56 = arith.constant 0 : index
    %c2_57 = arith.constant 2 : index
    %87 = memref.load %arg1[%c0_56, %c2_57] : memref<3x3xf32, #tpu.memory_space<smem>>
    %88 = vector.broadcast %87 : f32 to vector<16x128xf32>
    %89 = arith.mulf %86, %88 : vector<16x128xf32>
    %90 = arith.addf %85, %89 : vector<16x128xf32>
    %c1_58 = arith.constant 1 : index
    %c2_59 = arith.constant 2 : index
    %91 = memref.load %arg1[%c1_58, %c2_59] : memref<3x3xf32, #tpu.memory_space<smem>>
    %92 = vector.broadcast %91 : f32 to vector<16x128xf32>
    %93 = arith.mulf %55, %92 : vector<16x128xf32>
    %94 = arith.addf %90, %93 : vector<16x128xf32>
    %c15_i32_60 = arith.constant 15 : i32
    %95 = tpu.dynamic_rotate %55 by %c15_i32_60 dim 0 : vector<16x128xf32>, i32 -> vector<16x128xf32>
    %c2_61 = arith.constant 2 : index
    %c2_62 = arith.constant 2 : index
    %96 = memref.load %arg1[%c2_61, %c2_62] : memref<3x3xf32, #tpu.memory_space<smem>>
    %97 = vector.broadcast %96 : f32 to vector<16x128xf32>
    %98 = arith.mulf %95, %97 : vector<16x128xf32>
    %99 = arith.addf %94, %98 : vector<16x128xf32>
    %c0_63 = arith.constant 0 : index
    %c0_64 = arith.constant 0 : index
    %100 = vector.load %arg5[%c0_63, %c0_64] : memref<16x128xf32, #tpu.memory_space<vmem>>, vector<16x128xf32>
    tpu.vector_store %arg5[%c0_63, %c0_64], %99 {strides = array<i32>} : memref<16x128xf32, #tpu.memory_space<vmem>>, vector<16x128xf32>,
    %c0_65 = arith.constant 0 : index
    %c0_66 = arith.constant 0 : index
    %101 = vector.load %arg5[%c0_65, %c0_66] : memref<16x128xf32, #tpu.memory_space<vmem>>, vector<16x16xf32>
    %c0_67 = arith.constant 0 : index
    %c0_68 = arith.constant 0 : index
    %c0_69 = arith.constant 0 : index
    %102 = vector.load %arg4[%c0_67, %c0_68, %c0_69] : memref<2x16x16xf32, #tpu.memory_space<vmem>>, vector<1x16x16xf32>
    %103 = vector.shape_cast %102 : vector<1x16x16xf32> to vector<16x16xf32>
    %104 = vector.shape_cast %101 : vector<16x16xf32> to vector<1x16x16xf32>
    tpu.vector_store %arg4[%c0_67, %c0_68, %c0_69], %104 {strides = array<i32>} : memref<2x16x16xf32, #tpu.memory_space<vmem>>, vector<1x16x16xf32>,
    %c0_70 = arith.constant 0 : index
    %c16_71 = arith.constant 16 : index
    %105 = vector.load %arg5[%c0_70, %c16_71] : memref<16x128xf32, #tpu.memory_space<vmem>>, vector<16x16xf32>
    %c1_72 = arith.constant 1 : index
    %c0_73 = arith.constant 0 : index
    %c0_74 = arith.constant 0 : index
    %106 = vector.load %arg4[%c1_72, %c0_73, %c0_74] : memref<2x16x16xf32, #tpu.memory_space<vmem>>, vector<1x16x16xf32>
    %107 = vector.shape_cast %106 : vector<1x16x16xf32> to vector<16x16xf32>
    %108 = vector.shape_cast %105 : vector<16x16xf32> to vector<1x16x16xf32>
    tpu.vector_store %arg4[%c1_72, %c0_73, %c0_74], %108 {strides = array<i32>} : memref<2x16x16xf32, #tpu.memory_space<vmem>>, vector<1x16x16xf32>,
    return
  }
  func.func @transform_0(%arg0: i32) -> (i32, i32) {
    %c0_i32 = arith.constant 0 : i32
    %c0_i32_0 = arith.constant 0 : i32
    %c0_i32_1 = arith.constant 0 : i32
    return %c0_i32, %c0_i32_0 : i32, i32
  }
  func.func @transform_1(%arg0: i32) -> i32 {
    %c0_i32 = arith.constant 0 : i32
    %c0_i32_0 = arith.constant 0 : i32
    return %c0_i32 : i32
  }
  func.func @transform_2(%arg0: i32) -> (i32, i32, i32) {
    %c0_i32 = arith.constant 0 : i32
    %c0_i32_0 = arith.constant 0 : i32
    %c0_i32_1 = arith.constant 0 : i32
    return %arg0, %c0_i32, %c0_i32_0 : i32, i32, i32
  }
  func.func @transform_3(%arg0: i32) -> (i32, i32, i32) {
    %c0_i32 = arith.constant 0 : i32
    %c0_i32_0 = arith.constant 0 : i32
    %c0_i32_1 = arith.constant 0 : i32
    return %arg0, %c0_i32, %c0_i32_0 : i32, i32, i32
  }
}

</mosaic_0001>

<llo_original>
// kernel: tpu_custom_call.1
$region0: #{tpu_custom_call.1}
  #allocation0 [shape = 'u32[]', space=smem, size = 0x4, offset = 0x4, fixed_abs, tag = 'smem constant byte address 0x4 - core index']
  #allocation1 [shape = 'u32[72,128]{1,0:T(1,128)}', space=vmem, size = 0x9000, scoped, tag = 'internal scratch']
  #allocation2 [shape = 'f32[16,128]{1,0:T(8,128)}', space=vmem, size = 0x2000, scoped, tag = 'scratch operand']
  #allocation3 [shape = 'f32[1]{0:T(128)S(6)}', space=smem, size = 0x200, scoped, tag = 'scoped memory for tpu_custom_call.1']
  %s0 = inlined_call_operand.hbm [shape: f32[3,3], index: 0, kind: input, shape index: {}]
  %s1 = inlined_call_operand.<no memory space> [shape: f32[1], index: 1, kind: input, shape index: {}]
  %s2 = inlined_call_operand.hbm [shape: f32[2,16,16], index: 2, kind: input, shape index: {}]
  %s3 = inlined_call_operand.hbm [shape: f32[2,16,16], index: 3, kind: output, shape index: {}]
  %s4 = sld [smem:[#allocation0]]
  $region30: #{tpu_custom_call.1} parent=0
    _
  %s6 = ssub.s32 1, %s4
  %s7 = scalar_select 0, %s6, %s4
  %8 = sst [smem:[#allocation3]] %s1
  $region1: #{tpu_custom_call.1} parent=0
    #allocation4 [shape = 'u8[2048]{0}', space=smem, size = 0x800, scoped, tag = 'input window, operand 0, single buffered']
    #allocation5 [shape = 's32[1]{0}', space=sflag, size = 0x4, scoped, tag = 'scoped memory for tpu_custom_call.1']
    #allocation6 [shape = 's32[1]{0}', space=sflag, size = 0x4, scoped, tag = 'scoped memory for tpu_custom_call.1']
    #allocation7 [shape = 's32[1]{0}', space=sflag, size = 0x4, scoped, tag = 'scoped memory for tpu_custom_call.1']
    #allocation8 [shape = 'u8[16384]{0}', space=vmem, size = 0x4000, scoped, tag = 'input window, operand 2, single buffered']
    #allocation9 [shape = 'u8[16384]{0}', space=vmem, size = 0x4000, scoped, tag = 'output window, operand 0, single buffered']
    %9 = vsyncpa [#allocation7], 0
    %10 = vsyncpa [#allocation5], 0
    %11 = vsyncpa [#allocation6], 0
    // Predicated region
    $region2: #{tpu_custom_call.1} parent=1 // pred_check
      _
    $region3: #{tpu_custom_call.1} parent=1 // pred_check_branch
      %13 = sbr.rel (0) target = $region5
    $region4: #{tpu_custom_call.1} parent=1 // pred_region
      %15 = vsyncadd [#allocation7], 0
      %s17 = sshll.u32 %s0, 4
      %s18 = int_to_ptr.hbm [resolvable:$true] %s17
      %20 = dma.hbm_to_smem %s18, 64, [#allocation4], [#allocation7]
    $region5: #{tpu_custom_call.1} parent=1 // pred_fallthru
      _
    // Predicated region
    $region6: #{tpu_custom_call.1} parent=1 // pred_check
      _
    $region7: #{tpu_custom_call.1} parent=1 // pred_check_branch
      %22 = sbr.rel (0) target = $region9
    $region8: #{tpu_custom_call.1} parent=1 // pred_region
      _
    $region9: #{tpu_custom_call.1} parent=1 // pred_fallthru
      _
    // Predicated region
    $region10: #{tpu_custom_call.1} parent=1 // pred_check
      _
    $region11: #{tpu_custom_call.1} parent=1 // pred_check_branch
      %24 = sbr.rel (0) target = $region13
    $region12: #{tpu_custom_call.1} parent=1 // pred_region
      %26 = vsyncadd [#allocation5], 0
      %s27 = sshll.u32 %s2, 4
      %s28 = int_to_ptr.hbm [resolvable:$true] %s27
      %s29 = sshll.u32 [#allocation8], 4
      %s30 = int_to_ptr.vmem [resolvable:$true] %s29
      %35 = dma.hbm_to_vmem [thread:$0]  %s28, 512, %s30, [#allocation5], 128, 128, 8
    $region13: #{tpu_custom_call.1} parent=1 // pred_fallthru
      _
    // Predicated region
    $region14: #{tpu_custom_call.1} parent=1 // pred_check
      _
    $region15: #{tpu_custom_call.1} parent=1 // pred_check_branch
      %37 = sbr.rel (0) target = $region17
    $region16: #{tpu_custom_call.1} parent=1 // pred_region
      %39 = dma.done [#allocation7], 64
    $region17: #{tpu_custom_call.1} parent=1 // pred_fallthru
      _
    // Predicated region
    $region18: #{tpu_custom_call.1} parent=1 // pred_check
      _
    $region19: #{tpu_custom_call.1} parent=1 // pred_check_branch
      %41 = sbr.rel (0) target = $region21
    $region20: #{tpu_custom_call.1} parent=1 // pred_region
      %43 = dma.done [#allocation5], 512
    $region21: #{tpu_custom_call.1} parent=1 // pred_fallthru
      _
    %44 = sfence
    %v45 = vld [vmem:[#allocation8] sm:$0xff]
    %v46 = vld [vmem:[#allocation8 + $0x8] sm:$0xff]
    %vm47 = vcmask 130048
    %48 = vst.msk [vmem:[#allocation2] sm:$0xff] %vm47, %v45
    %49 = vst.msk [vmem:[#allocation2 + $0x8] sm:$0xff] %vm47, %v46
    %s50 = scalar_lea.vmem [#allocation8], 16
    %v51 = vld [vmem:[%s50] sm:$0xff]
    %v52 = vld [vmem:[%s50 + $0x8] sm:$0xff]
    %55 = vrot.lane.b32.xlu0 %v51, 16
    %v56 = vpop.permute.xlu0 %55
    %57 = vrot.lane.b32.xlu0 %v52, 16
    %v58 = vpop.permute.xlu0 %57
    %vm61 = vcmask 261248
    %62 = vst.msk [vmem:[#allocation2] sm:$0xff] %vm61, %v56
    %63 = vst.msk [vmem:[#allocation2 + $0x8] sm:$0xff] %vm61, %v58
    %v64 = vld [vmem:[%s50] sm:$0xff]
    %v65 = vld [vmem:[%s50 + $0x8] sm:$0xff]
    %68 = vrot.lane.b32.xlu0 %v64, 32
    %v69 = vpop.permute.xlu0 %68
    %70 = vrot.lane.b32.xlu0 %v65, 32
    %v71 = vpop.permute.xlu0 %70
    %vm74 = vcmask 392448
    %75 = vst.msk [vmem:[#allocation2] sm:$0xff] %vm74, %v69
    %76 = vst.msk [vmem:[#allocation2 + $0x8] sm:$0xff] %vm74, %v71
    %v77 = vld [vmem:[%s50] sm:$0xff]
    %v78 = vld [vmem:[%s50 + $0x8] sm:$0xff]
    %81 = vrot.lane.b32.xlu0 %v77, 48
    %v82 = vpop.permute.xlu0 %81
    %83 = vrot.lane.b32.xlu0 %v78, 48
    %v84 = vpop.permute.xlu0 %83
    %vm87 = vcmask 523648
    %88 = vst.msk [vmem:[#allocation2] sm:$0xff] %vm87, %v82
    %89 = vst.msk [vmem:[#allocation2 + $0x8] sm:$0xff] %vm87, %v84
    %v90 = vld [vmem:[%s50] sm:$0xff]
    %v91 = vld [vmem:[%s50 + $0x8] sm:$0xff]
    %94 = vrot.lane.b32.xlu0 %v90, 64
    %v95 = vpop.permute.xlu0 %94
    %96 = vrot.lane.b32.xlu0 %v91, 64
    %v97 = vpop.permute.xlu0 %96
    %vm100 = vcmask 654848
    %101 = vst.msk [vmem:[#allocation2] sm:$0xff] %vm100, %v95
    %102 = vst.msk [vmem:[#allocation2 + $0x8] sm:$0xff] %vm100, %v97
    %v103 = vld [vmem:[%s50] sm:$0xff]
    %v104 = vld [vmem:[%s50 + $0x8] sm:$0xff]
    %107 = vrot.lane.b32.xlu0 %v103, 80
    %v108 = vpop.permute.xlu0 %107
    %109 = vrot.lane.b32.xlu0 %v104, 80
    %v110 = vpop.permute.xlu0 %109
    %vm113 = vcmask 786048
    %114 = vst.msk [vmem:[#allocation2] sm:$0xff] %vm113, %v108
    %115 = vst.msk [vmem:[#allocation2 + $0x8] sm:$0xff] %vm113, %v110
    %v116 = vld [vmem:[%s50] sm:$0xff]
    %v117 = vld [vmem:[%s50 + $0x8] sm:$0xff]
    %120 = vrot.lane.b32.xlu0 %v116, 96
    %v121 = vpop.permute.xlu0 %120
    %122 = vrot.lane.b32.xlu0 %v117, 96
    %v123 = vpop.permute.xlu0 %122
    %vm126 = vcmask 917248
    %127 = vst.msk [vmem:[#allocation2] sm:$0xff] %vm126, %v121
    %128 = vst.msk [vmem:[#allocation2 + $0x8] sm:$0xff] %vm126, %v123
    %v129 = vld [vmem:[%s50] sm:$0xff]
    %v130 = vld [vmem:[%s50 + $0x8] sm:$0xff]
    %133 = vrot.lane.b32.xlu0 %v129, 112
    %v134 = vpop.permute.xlu0 %133
    %135 = vrot.lane.b32.xlu0 %v130, 112
    %v136 = vpop.permute.xlu0 %135
    %vm139 = vcmask 1048448
    %140 = vst.msk [vmem:[#allocation2] sm:$0xff] %vm139, %v134
    %141 = vst.msk [vmem:[#allocation2 + $0x8] sm:$0xff] %vm139, %v136
    %v142 = vld [vmem:[#allocation2] sm:$0xff]
    %v143 = vld [vmem:[#allocation2 + $0x8] sm:$0xff]
    %v144 = vlaneseq
    %v145 = vand.u32 %v144, 127
    %vm146 = vcmp.lt.s32.totalorder %v145, 0
    %v147 = vsub.s32 0, %v145
    %v148 = vsel %vm146, %v147, %v145
    %v149 = vshrl.u32 %v148, 4
    %v150 = vand.u32 %v148, 15
    %v151 = vsub.s32 0, %v150
    %v152 = vsel %vm146, %v151, %v150
    %vm153 = vcmp.ne.s32.totalorder %v152, 0
    %vm154 = vcmp.lt.s32.totalorder %v152, 0
    %vm155 = vmand %vm154, %vm153
    %v156 = vadd.s32 %v152, 16
    %v157 = vsel %vm155, %v156, %v152
    %vm158 = vcmp.eq.s32.totalorder %v157, 0
    %vm159 = vcmp.eq.s32.totalorder %v157, 15
    %160 = vrot.lane.b32.xlu0 %v142, 113
    %v161 = vpop.permute.xlu0 %160
    %162 = vrot.lane.b32.xlu0 %v143, 113
    %v163 = vpop.permute.xlu0 %162
    %164 = vrot.lane.b32.xlu0 %v142, 1
    %v165 = vpop.permute.xlu0 %164
    %166 = vrot.lane.b32.xlu0 %v143, 1
    %v167 = vpop.permute.xlu0 %166
    %v168 = vsel %vm158, 1, 0
    %vm169 = vcmp.eq.s32.totalorder %v168, 1
    %v170 = vsel %vm169, %v161, %v165
    %v171 = vsel %vm169, %v163, %v167
    %172 = vrot.lane.b32.xlu0 %v142, 15
    %v173 = vpop.permute.xlu0 %172
    %174 = vrot.lane.b32.xlu0 %v143, 15
    %v175 = vpop.permute.xlu0 %174
    %176 = vrot.lane.b32.xlu0 %v142, 127
    %v177 = vpop.permute.xlu0 %176
    %178 = vrot.lane.b32.xlu0 %v143, 127
    %v179 = vpop.permute.xlu0 %178
    %v180 = vsel %vm159, 1, 0
    %vm181 = vcmp.eq.s32.totalorder %v180, 1
    %v182 = vsel %vm181, %v173, %v177
    %v183 = vsel %vm181, %v175, %v179
    %s184 = sld [smem:[#allocation3]]
    %v185 = vstv %s184
    %v186 = vrot.slane %v170, 7
    %v187 = vrot.slane %v171, 7
    %v188 = vlaneseq
    %v189 = vshrl.u32 %v188, 7
    %vm190 = vcmp.lt.s32.totalorder %v189, 1
    %v191 = vsel %vm190, %v186, %v187
    %v192 = vsel %vm190, %v187, %v186
    %s193 = sld [smem:[#allocation4]]
    %v194 = vstv %s193
    %v195 = vmul.f32 %v192, %v194
    %v196 = vmul.f32 %v191, %v194
    %v197 = vadd.f32 %v185, %v195
    %v198 = vadd.f32 %v185, %v196
    %s199 = sld [smem:[#allocation4 + $0x80]]
    %v200 = vstv %s199
    %v201 = vmul.f32 %v170, %v200
    %v202 = vmul.f32 %v171, %v200
    %v203 = vadd.f32 %v197, %v201
    %v204 = vadd.f32 %v198, %v202
    %v205 = vrot.slane %v170, 1
    %v206 = vrot.slane %v171, 1
    %vm207 = vcmp.lt.s32.totalorder %v189, 7
    %v208 = vsel %vm207, %v205, %v206
    %v209 = vsel %vm207, %v206, %v205
    %s210 = sld [smem:[#allocation4 + $0x100]]
    %v211 = vstv %s210
    %v212 = vmul.f32 %v208, %v211
    %v213 = vmul.f32 %v209, %v211
    %v214 = vadd.f32 %v203, %v212
    %v215 = vadd.f32 %v204, %v213
    %v216 = vrot.slane %v142, 7
    %v217 = vrot.slane %v143, 7
    %v218 = vsel %vm190, %v216, %v217
    %v219 = vsel %vm190, %v217, %v216
    %s220 = sld [smem:[#allocation4 + $0x1]]
    %v221 = vstv %s220
    %v222 = vmul.f32 %v219, %v221
    %v223 = vmul.f32 %v218, %v221
    %v224 = vadd.f32 %v214, %v222
    %v225 = vadd.f32 %v215, %v223
    %s226 = sld [smem:[#allocation4 + $0x81]]
    %v227 = vstv %s226
    %v228 = vmul.f32 %v142, %v227
    %v229 = vmul.f32 %v143, %v227
    %v230 = vadd.f32 %v224, %v228
    %v231 = vadd.f32 %v225, %v229
    %v232 = vrot.slane %v142, 1
    %v233 = vrot.slane %v143, 1
    %v234 = vsel %vm207, %v232, %v233
    %v235 = vsel %vm207, %v233, %v232
    %s236 = sld [smem:[#allocation4 + $0x101]]
    %v237 = vstv %s236
    %v238 = vmul.f32 %v234, %v237
    %v239 = vmul.f32 %v235, %v237
    %v240 = vadd.f32 %v230, %v238
    %v241 = vadd.f32 %v231, %v239
    %v242 = vrot.slane %v182, 7
    %v243 = vrot.slane %v183, 7
    %v244 = vsel %vm190, %v242, %v243
    %v245 = vsel %vm190, %v243, %v242
    %s246 = sld [smem:[#allocation4 + $0x2]]
    %v247 = vstv %s246
    %v248 = vmul.f32 %v245, %v247
    %v249 = vmul.f32 %v244, %v247
    %v250 = vadd.f32 %v240, %v248
    %v251 = vadd.f32 %v241, %v249
    %s252 = sld [smem:[#allocation4 + $0x82]]
    %v253 = vstv %s252
    %v254 = vmul.f32 %v182, %v253
    %v255 = vmul.f32 %v183, %v253
    %v256 = vadd.f32 %v250, %v254
    %v257 = vadd.f32 %v251, %v255
    %v258 = vrot.slane %v182, 1
    %v259 = vrot.slane %v183, 1
    %v260 = vsel %vm207, %v258, %v259
    %v261 = vsel %vm207, %v259, %v258
    %s262 = sld [smem:[#allocation4 + $0x102]]
    %v263 = vstv %s262
    %v264 = vmul.f32 %v260, %v263
    %v265 = vmul.f32 %v261, %v263
    %v266 = vadd.f32 %v256, %v264
    %v267 = vadd.f32 %v257, %v265
    %268 = vst [vmem:[#allocation2] sm:$0xff] %v266
    %269 = vst [vmem:[#allocation2 + $0x8] sm:$0xff] %v267
    %v270 = vld [vmem:[#allocation2] sm:$0xff]
    %v271 = vld [vmem:[#allocation2 + $0x8] sm:$0xff]
    %272 = vst.msk [vmem:[#allocation9] sm:$0xff] %vm47, %v270
    %273 = vst.msk [vmem:[#allocation9 + $0x8] sm:$0xff] %vm47, %v271
    %v274 = vld [vmem:[#allocation2] sm:$0xff]
    %v275 = vld [vmem:[#allocation2 + $0x8] sm:$0xff]
    %278 = vrot.lane.b32.xlu0 %v274, 112
    %v279 = vpop.permute.xlu0 %278
    %280 = vrot.lane.b32.xlu0 %v275, 112
    %v281 = vpop.permute.xlu0 %280
    %s284 = scalar_lea.vmem [#allocation9], 16
    %285 = vst.msk [vmem:[%s284] sm:$0xff] %vm47, %v279
    %286 = vst.msk [vmem:[%s284 + $0x8] sm:$0xff] %vm47, %v281
    // Predicated region
    $region22: #{tpu_custom_call.1} parent=1 // pred_check
      _
    $region23: #{tpu_custom_call.1} parent=1 // pred_check_branch
      %288 = sbr.rel (0) target = $region25
    $region24: #{tpu_custom_call.1} parent=1 // pred_region
      %290 = vsyncadd [#allocation6], 0
      %s291 = sshll.u32 [#allocation9], 4
      %s292 = int_to_ptr.vmem [resolvable:$true] %s291
      %s293 = sshll.u32 %s3, 4
      %s294 = int_to_ptr.hbm [resolvable:$true] %s293
      %299 = dma.vmem_to_hbm [thread:$0]  %s292, 512, %s294, [#allocation6], 128, 128, 8
    $region25: #{tpu_custom_call.1} parent=1 // pred_fallthru
      _
    // Predicated region
    $region26: #{tpu_custom_call.1} parent=1 // pred_check
      _
    $region27: #{tpu_custom_call.1} parent=1 // pred_check_branch
      %301 = sbr.rel (0) target = $region29
    $region28: #{tpu_custom_call.1} parent=1 // pred_region
      %303 = dma.done [#allocation6], 512
    $region29: #{tpu_custom_call.1} parent=1 // pred_fallthru
      _
    %304 = vsyncpa [#allocation5], 1
    %305 = vsyncpa [#allocation6], 1
    %306 = vsyncpa [#allocation7], 1

</llo_original>
